<compile_context>
chip_gen: v7x
topology: tpu7x:2x2x1
jax: 0.10.0
libtpu: 0.0.40
codegen_flags: <defaults>
</compile_context>

<pallas_src>
import functools
import math

import jax
import jax.numpy as jnp
from jax.experimental import pallas as pl
from jax.experimental.pallas import tpu as pltpu


# ---------------------------------------------------------------------------
# generation-aware tuning knobs
# ---------------------------------------------------------------------------
@functools.lru_cache(maxsize=None)
def _gen_config():
    """Returns (vmem_limit_bytes, m_tile_cap) tuned per TPU generation."""
    try:
        vmem_cap = int(pltpu.get_tpu_info().vmem_capacity_bytes)
    except Exception:
        vmem_cap = 64 * 1024 * 1024          # unknown -> assume tightest (v7x)
    if vmem_cap >= 100 * 1024 * 1024:        # v5e / v6e: 128 MiB per TensorCore
        return 96 * 1024 * 1024, 1024
    return 40 * 1024 * 1024, 512             # v7x: 64 MiB per TensorCore


def _compiler_params(dimension_semantics):
    return pltpu.CompilerParams(
        dimension_semantics=dimension_semantics,
        vmem_limit_bytes=_gen_config()[0])


def _choose_m_tile(m):
    # Largest multiple-of-8 divisor of m up to the generation-specific cap.
    cap = _gen_config()[1]
    for t in (1024, 512, 256, 128, 64, 32, 16, 8):
        if t <= cap and m % t == 0:
            return t
    return m


def _choose_f_tile(f, cap=512):
    # FFN hidden-dim chunk: biggest 128-multiple divisor of F up to `cap`.
    for t in (512, 384, 256, 128):
        if t <= cap and f % t == 0:
            return t
    return f


# ---------------------------------------------------------------------------
# elementwise helpers (inside kernels)
# ---------------------------------------------------------------------------
def _erf_approx(x):
    # Abramowitz & Stegun 7.1.26 polynomial erf approximation (|err| < 1.5e-7),
    # reproduces HF DistilBERT's exact (erf-based) GELU.
    # TODO(synk): if a bundle dump shows the FFN kernel VALU-bound on v5e,
    # switch to the tanh-based GELU (tanh goes to the EUP slot).
    a1, a2, a3, a4, a5 = (0.254829592, -0.284496736, 1.421413741,
                          -1.453152027, 1.061405429)
    p = 0.3275911
    sign = jnp.sign(x)
    xa = jnp.abs(x)
    t = 1.0 / (1.0 + p * xa)
    poly = t * (a1 + t * (a2 + t * (a3 + t * (a4 + t * a5))))
    return sign * (1.0 - poly * jnp.exp(-xa * xa))


def _gelu_exact(x):
    return 0.5 * x * (1.0 + _erf_approx(x * (1.0 / math.sqrt(2.0))))


def _layernorm_f32(y, g, b, eps=1e-12):
    mu = jnp.mean(y, axis=-1, keepdims=True)
    var = jnp.mean((y - mu) * (y - mu), axis=-1, keepdims=True)
    return (y - mu) * jax.lax.rsqrt(var + eps) * g + b


# ---------------------------------------------------------------------------
# Pallas kernels
# ---------------------------------------------------------------------------
def _embed_ln_kernel(x_ref, g_ref, b_ref, o_ref):
    # o = LayerNorm(x) * g + b   (embedding LN; dropout = identity in eval)
    y = x_ref[...].astype(jnp.float32)
    o_ref[...] = _layernorm_f32(y, g_ref[...], b_ref[...]).astype(o_ref.dtype)


def _attn_block_kernel(x_ref, bias_ref, qkv_w_ref, qkv_b_ref, ow_ref, ob_ref,
                       g_ref, bln_ref, o_ref, qkv_sc, ctx_sc, *, n_heads):
    # One batch element per grid step; lane-dense (1, S, D) blocks.
    # Fuses: QKV projection + per-head SDPA (softmax + context) + single
    #        full-width output projection + residual add + LayerNorm1.
    S = x_ref.shape[1]
    D = x_ref.shape[2]
    dh = D // n_heads
    scale = 1.0 / math.sqrt(dh)
    bias = bias_ref[0]                                     # (1, S) f32 additive

    x = x_ref[0]                                           # (S, D) bf16
    # fused Q|K|V projection computed in-kernel (no HBM round trip)
    qkv_sc[...] = (jnp.dot(x, qkv_w_ref[...],
                           preferred_element_type=jnp.float32)
                   + qkv_b_ref[...]).astype(jnp.bfloat16)  # (S, 3D)

    # TODO(synk): the per-head lane slices at h*dh offsets (dh=64 at the real
    # size) are not 128-lane aligned for odd heads; if the MLIR dump shows
    # materialized copies, load two heads per iteration and split in-kernel.
    for h in range(n_heads):                               # static unroll
        qh = qkv_sc[:, h * dh:(h + 1) * dh]
        kh = qkv_sc[:, D + h * dh:D + (h + 1) * dh]
        vh = qkv_sc[:, 2 * D + h * dh:2 * D + (h + 1) * dh]
        # scores = q @ k^T (contract last dims, no explicit transpose)
        s = jax.lax.dot_general(qh, kh, (((1,), (1,)), ((), ())),
                                preferred_element_type=jnp.float32)   # (S, S)
        s = s * scale + bias
        m = jnp.max(s, axis=-1, keepdims=True)
        p = jnp.exp(s - m)
        w = p * pl.reciprocal(jnp.sum(p, axis=-1, keepdims=True), approx=True)
        ctx = jnp.dot(w.astype(jnp.bfloat16), vh,
                      preferred_element_type=jnp.float32)             # (S, dh)
        # lane-concatenate heads into the (S, D) context scratch
        ctx_sc[:, h * dh:(h + 1) * dh] = ctx.astype(jnp.bfloat16)

    # ONE full-width (K = D) output projection instead of H narrow (K = dh) ones
    attn = jnp.dot(ctx_sc[...], ow_ref[...],
                   preferred_element_type=jnp.float32)                # (S, D)
    y = attn + ob_ref[...] + x.astype(jnp.float32)
    o_ref[0] = _layernorm_f32(y, g_ref[...], bln_ref[...]).astype(o_ref.dtype)


def _ffn_ln_kernel(x_ref, w1_ref, b1_ref, w2_ref, b2_ref, g_ref, bln_ref,
                   o_ref, acc_ref):
    # F-tiled: per F-chunk  acc += GELU(x @ W1[:, f] + b1[f]) @ W2[f, :]
    # last F step:          o = LayerNorm(acc + b2 + x)
    f = pl.program_id(1)

    @pl.when(f == 0)
    def _():
        acc_ref[...] = jnp.zeros_like(acc_ref)

    x = x_ref[...]                                                    # (tm, D)
    h = jnp.dot(x, w1_ref[...],
                preferred_element_type=jnp.float32) + b1_ref[...]     # (tm, tf)
    h = _gelu_exact(h)
    acc_ref[...] += jnp.dot(h.astype(jnp.bfloat16), w2_ref[...],
                            preferred_element_type=jnp.float32)       # (tm, D)

    @pl.when(f == pl.num_programs(1) - 1)
    def _():
        y = acc_ref[...] + b2_ref[...] + x.astype(jnp.float32)
        o_ref[...] = _layernorm_f32(y, g_ref[...],
                                    bln_ref[...]).astype(o_ref.dtype)


def _head_kernel(x_ref, w1_ref, b1_ref, w2_ref, b2_ref, o_ref):
    # pooler = tanh(x @ pre_W + pre_b); dropout(0.1) = identity (eval);
    # logits = pooler @ cls_W + cls_b   (classifier width padded to 128 lanes)
    p = jnp.dot(x_ref[...], w1_ref[...],
                preferred_element_type=jnp.float32) + b1_ref[...]
    p = jnp.tanh(p)
    o_ref[...] = (jnp.dot(p.astype(jnp.bfloat16), w2_ref[...],
                          preferred_element_type=jnp.float32)
                  + b2_ref[...]).astype(o_ref.dtype)


# ---------------------------------------------------------------------------
# pallas_call wrappers
# ---------------------------------------------------------------------------
def embed_layernorm(x, gamma, beta):
    M, D = x.shape
    tm = _choose_m_tile(M)
    return pl.pallas_call(
        _embed_ln_kernel,
        out_shape=jax.ShapeDtypeStruct((M, D), jnp.bfloat16),
        grid=(M // tm,),
        in_specs=[pl.BlockSpec((tm, D), lambda i: (i, 0)),
                  pl.BlockSpec((1, D), lambda i: (0, 0)),
                  pl.BlockSpec((1, D), lambda i: (0, 0))],
        out_specs=pl.BlockSpec((tm, D), lambda i: (i, 0)),
        compiler_params=_compiler_params(("parallel",)),
    )(x, gamma, beta)


def attention_block(x, mask_bias, qkv_w, qkv_b, ow, ob, ln_g, ln_b, n_heads):
    B, S, D = x.shape
    N3 = qkv_w.shape[1]
    kernel = functools.partial(_attn_block_kernel, n_heads=n_heads)
    # TODO(synk): for v7x megacore balance at real shapes (small B, S=512),
    # additionally tile the grid over q-chunks (flash-style online softmax)
    # with K/V projected once per batch element into a persistent VMEM scratch.
    return pl.pallas_call(
        kernel,
        out_shape=jax.ShapeDtypeStruct((B, S, D), jnp.bfloat16),
        grid=(B,),
        in_specs=[pl.BlockSpec((1, S, D), lambda b: (b, 0, 0)),
                  pl.BlockSpec((1, 1, S), lambda b: (b, 0, 0)),
                  pl.BlockSpec((D, N3), lambda b: (0, 0)),
                  pl.BlockSpec((1, N3), lambda b: (0, 0)),
                  pl.BlockSpec((D, D), lambda b: (0, 0)),
                  pl.BlockSpec((1, D), lambda b: (0, 0)),
                  pl.BlockSpec((1, D), lambda b: (0, 0)),
                  pl.BlockSpec((1, D), lambda b: (0, 0))],
        out_specs=pl.BlockSpec((1, S, D), lambda b: (b, 0, 0)),
        scratch_shapes=[pltpu.VMEM((S, N3), jnp.bfloat16),   # fused QKV
                        pltpu.VMEM((S, D), jnp.bfloat16)],   # concat'd contexts
        compiler_params=_compiler_params(("parallel",)),
    )(x, mask_bias, qkv_w, qkv_b, ow, ob, ln_g, ln_b)


def ffn_block(x, w1, b1, w2, b2, ln_g, ln_b):
    M, D = x.shape
    F = w1.shape[1]
    tm = _choose_m_tile(M)
    tf = _choose_f_tile(F)
    return pl.pallas_call(
        _ffn_ln_kernel,
        out_shape=jax.ShapeDtypeStruct((M, D), jnp.bfloat16),
        grid=(M // tm, F // tf),
        in_specs=[pl.BlockSpec((tm, D), lambda i, f: (i, 0)),
                  pl.BlockSpec((D, tf), lambda i, f: (0, f)),
                  pl.BlockSpec((1, tf), lambda i, f: (0, f)),
                  pl.BlockSpec((tf, D), lambda i, f: (f, 0)),
                  pl.BlockSpec((1, D), lambda i, f: (0, 0)),
                  pl.BlockSpec((1, D), lambda i, f: (0, 0)),
                  pl.BlockSpec((1, D), lambda i, f: (0, 0))],
        out_specs=pl.BlockSpec((tm, D), lambda i, f: (i, 0)),
        scratch_shapes=[pltpu.VMEM((tm, D), jnp.float32)],
        compiler_params=_compiler_params(("parallel", "arbitrary")),
    )(x, w1, b1, w2, b2, ln_g, ln_b)


def classification_head(x0, pre_w, pre_b, cls_w, cls_b):
    B, D = x0.shape
    Cp = cls_w.shape[1]          # padded to a 128-lane multiple (lane-dense vst)
    return pl.pallas_call(
        _head_kernel,
        out_shape=jax.ShapeDtypeStruct((B, Cp), jnp.float32),
        grid=(1,),
        in_specs=[pl.BlockSpec((B, D), lambda i: (0, 0)),
                  pl.BlockSpec((D, D), lambda i: (0, 0)),
                  pl.BlockSpec((1, D), lambda i: (0, 0)),
                  pl.BlockSpec((D, Cp), lambda i: (0, 0)),
                  pl.BlockSpec((1, Cp), lambda i: (0, 0))],
        out_specs=pl.BlockSpec((B, Cp), lambda i: (0, 0)),
        compiler_params=_compiler_params(("arbitrary",)),
    )(x0, pre_w, pre_b, cls_w, cls_b)


# ---------------------------------------------------------------------------
# model (glue in plain JAX; all hot paths in the kernels above)
# ---------------------------------------------------------------------------
def init_params(key, *, vocab, max_pos, D, H, n_layers, ffn_dim, n_classes):
    # TODO(synk): DistilBertModel.from_pretrained checkpoint loading has no
    # in-script equivalent; deterministic synthetic weights are used instead.
    keys = iter(jax.random.split(key, 256))

    def w_bf16(shape, scale=0.02):      # matmul weights live in bf16 (MXU-native)
        return (scale * jax.random.normal(next(keys), shape,
                                          jnp.float32)).astype(jnp.bfloat16)

    def zeros(shape):
        return jnp.zeros(shape, jnp.float32)

    def ones(shape):
        return jnp.ones(shape, jnp.float32)

    layers = []
    for _ in range(n_layers):
        layers.append(dict(
            qkv_w=w_bf16((D, 3 * D)), qkv_b=zeros((1, 3 * D)),   # fused Q|K|V
            o_w=w_bf16((D, D)), o_b=zeros((1, D)),
            ln1_g=ones((1, D)), ln1_b=zeros((1, D)),
            w1=w_bf16((D, ffn_dim)), b1=zeros((1, ffn_dim)),
            w2=w_bf16((ffn_dim, D)), b2=zeros((1, D)),
            ln2_g=ones((1, D)), ln2_b=zeros((1, D)),
        ))

    n_classes_padded = ((n_classes + 127) // 128) * 128
    cls_w = jnp.zeros((D, n_classes_padded), jnp.bfloat16)
    cls_w = cls_w.at[:, :n_classes].set(w_bf16((D, n_classes)))

    return dict(
        word_emb=0.02 * jax.random.normal(next(keys), (vocab, D), jnp.float32),
        pos_emb=0.02 * jax.random.normal(next(keys), (max_pos, D), jnp.float32),
        emb_ln_g=ones((1, D)), emb_ln_b=zeros((1, D)),
        layers=layers,
        pre_w=w_bf16((D, D)), pre_b=zeros((1, D)),                   # pre_classifier
        cls_w=cls_w, cls_b=zeros((1, n_classes_padded)),             # classifier
        n_classes=n_classes, n_heads=H,
    )


def distilbert_class_forward(params, input_ids, attention_mask,
                             token_type_ids=None):
    # token_type_ids is accepted but unused, exactly like the PyTorch module.
    del token_type_ids
    B, S = input_ids.shape
    D = params['word_emb'].shape[1]
    H = params['n_heads']

    # embeddings: word + position (f32 gather in XLA), fused LayerNorm -> bf16
    x = params['word_emb'][input_ids] + params['pos_emb'][:S][None, :, :]
    x = embed_layernorm(x.reshape(B * S, D).astype(jnp.float32),
                        params['emb_ln_g'], params['emb_ln_b'])      # [B*S, D]

    # additive attention bias: 0 where attended, -1e9 where masked
    mask_bias = ((attention_mask.astype(jnp.float32) - 1.0) * 1e9).reshape(B, 1, S)

    for layer in params['layers']:
        # fused: QKV proj + SDPA + O-proj + residual + LN1 (one kernel)
        x = attention_block(x.reshape(B, S, D), mask_bias,
                            layer['qkv_w'], layer['qkv_b'],
                            layer['o_w'], layer['o_b'],
                            layer['ln1_g'], layer['ln1_b'], H).reshape(B * S, D)
        # fused: W1 + GELU + W2 + residual + LN2 (F-tiled, one kernel)
        x = ffn_block(x, layer['w1'], layer['b1'], layer['w2'], layer['b2'],
                      layer['ln2_g'], layer['ln2_b'])                # [B*S, D]

    hidden_state = x.reshape(B, S, D)
    pooler_in = hidden_state[:, 0]                                   # CLS, [B, D]
    logits = classification_head(pooler_in, params['pre_w'], params['pre_b'],
                                 params['cls_w'], params['cls_b'])
    return logits[:, :params['n_classes']]                           # drop pad lanes


# ---------------------------------------------------------------------------
if __name__ == "__main__":
    # Reduced synthetic DistilBERT config (real module: D=768, 12 heads, 6 layers).
    B, S, D, H, N_LAYERS, FFN, VOCAB, MAX_POS, N_CLASSES = (
        2, 16, 128, 4, 2, 512, 1000, 64, 6)

    key = jax.random.PRNGKey(0)
    k_param, k_ids = jax.random.split(key)
    params = init_params(k_param, vocab=VOCAB, max_pos=MAX_POS, D=D, H=H,
                         n_layers=N_LAYERS, ffn_dim=FFN, n_classes=N_CLASSES)

    input_ids = jax.random.randint(k_ids, (B, S), 0, VOCAB, dtype=jnp.int32)
    attention_mask = jnp.concatenate(
        [jnp.ones((B, S - 4), jnp.int32), jnp.zeros((B, 4), jnp.int32)], axis=1)
    attention_mask = attention_mask.at[0].set(1)  # first example fully unmasked
    token_type_ids = jnp.zeros((B, S), jnp.int32)  # unused by DistilBERT

    logits = distilbert_class_forward(params, input_ids, attention_mask,
                                      token_type_ids)
    logits = jax.block_until_ready(logits)
    assert logits.shape == (B, N_CLASSES) and logits.dtype == jnp.float32
    assert bool(jnp.all(jnp.isfinite(logits)))
    print("KERNEL_OK")
</pallas_src>

<mosaic_0001>
module attributes {stable_mosaic.version = 11 : i64} {
  func.func @_embed_ln_kernel(%arg0: i32, %arg1: memref<32x128xf32, #tpu.memory_space<vmem>>, %arg2: memref<1x128xf32, #tpu.memory_space<vmem>>, %arg3: memref<1x128xf32, #tpu.memory_space<vmem>>, %arg4: memref<32x128xbf16, #tpu.memory_space<vmem>>) attributes {dimension_semantics = [#tpu.dimension_semantics<parallel>], iteration_bounds = array<i64: 1>, scalar_prefetch = 0 : i64, scratch_operands = 0 : i64, tpu.core_type = #tpu.core_type<tc>, window_params = [{transform_indices = @transform_0, window_bounds = array<i64: 32, 128>}, {pipeline_mode = #tpu.pipeline_mode<synchronous>, transform_indices = @transform_1, window_bounds = array<i64: 1, 128>}, {pipeline_mode = #tpu.pipeline_mode<synchronous>, transform_indices = @transform_2, window_bounds = array<i64: 1, 128>}, {transform_indices = @transform_3, window_bounds = array<i64: 32, 128>}]} {
    %c0 = arith.constant 0 : index
    %c0_0 = arith.constant 0 : index
    %0 = vector.load %arg1[%c0, %c0_0] : memref<32x128xf32, #tpu.memory_space<vmem>>, vector<32x128xf32>
    %c0_1 = arith.constant 0 : index
    %c0_2 = arith.constant 0 : index
    %1 = vector.load %arg2[%c0_1, %c0_2] : memref<1x128xf32, #tpu.memory_space<vmem>>, vector<1x128xf32>
    %c0_3 = arith.constant 0 : index
    %c0_4 = arith.constant 0 : index
    %2 = vector.load %arg3[%c0_3, %c0_4] : memref<1x128xf32, #tpu.memory_space<vmem>>, vector<1x128xf32>
    %cst = arith.constant dense<0.000000e+00> : vector<32xf32>
    %3 = vector.multi_reduction <add>, %0, %cst [1] : vector<32x128xf32> to vector<32xf32>
    %4 = vector.shape_cast %3 : vector<32xf32> to vector<32x1xf32>
    %cst_5 = arith.constant 1.280000e+02 : f32
    %5 = vector.broadcast %cst_5 : f32 to vector<32x1xf32>
    %6 = arith.divf %4, %5 : vector<32x1xf32>
    %7 = vector.broadcast %6 : vector<32x1xf32> to vector<32x128xf32>
    %8 = arith.subf %0, %7 : vector<32x128xf32>
    %9 = vector.broadcast %6 : vector<32x1xf32> to vector<32x128xf32>
    %10 = arith.subf %0, %9 : vector<32x128xf32>
    %11 = arith.mulf %8, %10 : vector<32x128xf32>
    %cst_6 = arith.constant dense<0.000000e+00> : vector<32xf32>
    %12 = vector.multi_reduction <add>, %11, %cst_6 [1] : vector<32x128xf32> to vector<32xf32>
    %13 = vector.shape_cast %12 : vector<32xf32> to vector<32x1xf32>
    %cst_7 = arith.constant 1.280000e+02 : f32
    %14 = vector.broadcast %cst_7 : f32 to vector<32x1xf32>
    %15 = arith.divf %13, %14 : vector<32x1xf32>
    %16 = vector.broadcast %6 : vector<32x1xf32> to vector<32x128xf32>
    %17 = arith.subf %0, %16 : vector<32x128xf32>
    %cst_8 = arith.constant 9.99999996E-13 : f32
    %18 = vector.broadcast %cst_8 : f32 to vector<32x1xf32>
    %19 = arith.addf %15, %18 : vector<32x1xf32>
    %20 = math.rsqrt %19 : vector<32x1xf32>
    %21 = vector.broadcast %20 : vector<32x1xf32> to vector<32x128xf32>
    %22 = arith.mulf %17, %21 : vector<32x128xf32>
    %23 = vector.broadcast %1 : vector<1x128xf32> to vector<32x128xf32>
    %24 = arith.mulf %22, %23 : vector<32x128xf32>
    %25 = vector.broadcast %2 : vector<1x128xf32> to vector<32x128xf32>
    %26 = arith.addf %24, %25 : vector<32x128xf32>
    %27 = arith.truncf %26 : vector<32x128xf32> to vector<32x128xbf16>
    %c0_9 = arith.constant 0 : index
    %c0_10 = arith.constant 0 : index
    %28 = vector.load %arg4[%c0_9, %c0_10] : memref<32x128xbf16, #tpu.memory_space<vmem>>, vector<32x128xbf16>
    tpu.vector_store %arg4[%c0_9, %c0_10], %27 {strides = array<i32>} : memref<32x128xbf16, #tpu.memory_space<vmem>>, vector<32x128xbf16>,
    return
  }
  func.func @transform_0(%arg0: i32) -> (i32, i32) {
    %c0_i32 = arith.constant 0 : i32
    %c0_i32_0 = arith.constant 0 : i32
    return %arg0, %c0_i32 : i32, i32
  }
  func.func @transform_1(%arg0: i32) -> (i32, i32) {
    %c0_i32 = arith.constant 0 : i32
    %c0_i32_0 = arith.constant 0 : i32
    %c0_i32_1 = arith.constant 0 : i32
    return %c0_i32, %c0_i32_0 : i32, i32
  }
  func.func @transform_2(%arg0: i32) -> (i32, i32) {
    %c0_i32 = arith.constant 0 : i32
    %c0_i32_0 = arith.constant 0 : i32
    %c0_i32_1 = arith.constant 0 : i32
    return %c0_i32, %c0_i32_0 : i32, i32
  }
  func.func @transform_3(%arg0: i32) -> (i32, i32) {
    %c0_i32 = arith.constant 0 : i32
    %c0_i32_0 = arith.constant 0 : i32
    return %arg0, %c0_i32 : i32, i32
  }
}

</mosaic_0001>

<llo_original>
// kernel: tpu_custom_call.1
$region0: #{tpu_custom_call.1}
  #allocation0 [shape = 'u32[]', space=smem, size = 0x4, offset = 0x4, fixed_abs, tag = 'smem constant byte address 0x4 - core index']
  #allocation1 [shape = 'u32[144,128]{1,0:T(1,128)}', space=vmem, size = 0x12000, scoped, tag = 'internal scratch']
  %s0 = inlined_call_operand.hbm [shape: f32[32,128], index: 0, kind: input, shape index: {}]
  %s1 = inlined_call_operand.vmem [shape: f32[1,128], index: 1, kind: input, shape index: {}]
  %s2 = inlined_call_operand.vmem [shape: f32[1,128], index: 2, kind: input, shape index: {}]
  %s3 = inlined_call_operand.hbm [shape: bf16[32,128], index: 3, kind: output, shape index: {}]
  %s4 = sld [smem:[#allocation0]]
  $region26: #{tpu_custom_call.1} parent=0
    _
  %s6 = ssub.s32 1, %s4
  %s7 = scalar_select 0, %s6, %s4
  $region1: #{tpu_custom_call.1} parent=0
    #allocation2 [shape = 'u8[16384]{0}', space=vmem, size = 0x4000, scoped, tag = 'input window, operand 0, single buffered']
    #allocation3 [shape = 's32[1]{0}', space=sflag, size = 0x4, scoped, tag = 'scoped memory for tpu_custom_call.1']
    #allocation4 [shape = 's32[1]{0}', space=sflag, size = 0x4, scoped, tag = 'scoped memory for tpu_custom_call.1']
    #allocation5 [shape = 'u8[8192]{0}', space=vmem, size = 0x2000, scoped, tag = 'output window, operand 0, single buffered']
    %8 = vsyncpa [#allocation3], 0
    %9 = vsyncpa [#allocation4], 0
    // Predicated region
    $region2: #{tpu_custom_call.1} parent=1 // pred_check
      _
    $region3: #{tpu_custom_call.1} parent=1 // pred_check_branch
      %11 = sbr.rel (0) target = $region5
    $region4: #{tpu_custom_call.1} parent=1 // pred_region
      %s13 = ssub.s32 512, 512
      %14 = vsyncadd [#allocation3], %s13
      %s15 = sshll.u32 [#allocation2], 4
      %s16 = int_to_ptr.vmem [resolvable:$true] %s15
      %21 = dma.hbm_to_vmem [thread:$0]  %s0, 512, %s16, [#allocation3], 128, 128, 8
    $region5: #{tpu_custom_call.1} parent=1 // pred_fallthru
      _
    // Predicated region
    $region6: #{tpu_custom_call.1} parent=1 // pred_check
      _
    $region7: #{tpu_custom_call.1} parent=1 // pred_check_branch
      %23 = sbr.rel (0) target = $region9
    $region8: #{tpu_custom_call.1} parent=1 // pred_region
      _
    $region9: #{tpu_custom_call.1} parent=1 // pred_fallthru
      _
    // Predicated region
    $region10: #{tpu_custom_call.1} parent=1 // pred_check
      _
    $region11: #{tpu_custom_call.1} parent=1 // pred_check_branch
      %25 = sbr.rel (0) target = $region13
    $region12: #{tpu_custom_call.1} parent=1 // pred_region
      _
    $region13: #{tpu_custom_call.1} parent=1 // pred_fallthru
      _
    // Predicated region
    $region14: #{tpu_custom_call.1} parent=1 // pred_check
      _
    $region15: #{tpu_custom_call.1} parent=1 // pred_check_branch
      %27 = sbr.rel (0) target = $region17
    $region16: #{tpu_custom_call.1} parent=1 // pred_region
      %28 = dma.done [#allocation3], 512
    $region17: #{tpu_custom_call.1} parent=1 // pred_fallthru
      _
    %v29 = vld [vmem:[#allocation2] sm:$0xff]
    %v30 = vld [vmem:[#allocation2 + $0x8] sm:$0xff]
    %v31 = vld [vmem:[#allocation2 + $0x10] sm:$0xff]
    %v32 = vld [vmem:[#allocation2 + $0x18] sm:$0xff]
    %v33 = vld [vmem:[%s1] sm:$0x1]
    %v34 = vld [vmem:[%s2] sm:$0x1]
    %35 = vadd.xlane.f32.xlu0 %v29
    %v36 = vpop.xlane.xlu0 %35
    %37 = vadd.xlane.f32.xlu0 %v30
    %v38 = vpop.xlane.xlu0 %37
    %39 = vadd.xlane.f32.xlu0 %v31
    %v40 = vpop.xlane.xlu0 %39
    %41 = vadd.xlane.f32.xlu0 %v32
    %v42 = vpop.xlane.xlu0 %41
    %v43 = vrcp.pop 128.0
    %v44 = vmul.f32 %v36, %v43
    %v45 = vmul.f32 %v38, %v43
    %v46 = vmul.f32 %v40, %v43
    %v47 = vmul.f32 %v42, %v43
    %v48 = vsub.f32 %v29, %v44
    %v49 = vsub.f32 %v30, %v45
    %v50 = vsub.f32 %v31, %v46
    %v51 = vsub.f32 %v32, %v47
    %v52 = vmul.f32 %v48, %v48
    %v53 = vmul.f32 %v49, %v49
    %v54 = vmul.f32 %v50, %v50
    %v55 = vmul.f32 %v51, %v51
    %56 = vadd.xlane.f32.xlu0 %v52
    %v57 = vpop.xlane.xlu0 %56
    %58 = vadd.xlane.f32.xlu0 %v53
    %v59 = vpop.xlane.xlu0 %58
    %60 = vadd.xlane.f32.xlu0 %v54
    %v61 = vpop.xlane.xlu0 %60
    %62 = vadd.xlane.f32.xlu0 %v55
    %v63 = vpop.xlane.xlu0 %62
    %v64 = vmul.f32 %v57, %v43
    %v65 = vmul.f32 %v59, %v43
    %v66 = vmul.f32 %v61, %v43
    %v67 = vmul.f32 %v63, %v43
    %v68 = vadd.f32 %v64, 1e-12
    %v69 = vadd.f32 %v65, 1e-12
    %v70 = vadd.f32 %v66, 1e-12
    %v71 = vadd.f32 %v67, 1e-12
    %v72 = vrsqrt.pop %v68
    %v73 = vrsqrt.pop %v69
    %v74 = vrsqrt.pop %v70
    %v75 = vrsqrt.pop %v71
    %v76 = vmul.f32 %v48, %v72
    %v77 = vmul.f32 %v49, %v73
    %v78 = vmul.f32 %v50, %v74
    %v79 = vmul.f32 %v51, %v75
    %v81 = vlaneseq
    %v82 = vshrl.u32 %v81, 7
    %v83 = vsub.s32 0, %v82
    %v84 = vrot.slane %v33, %v83
    %v86 = vmul.f32 %v76, %v84
    %v87 = vmul.f32 %v77, %v84
    %v88 = vmul.f32 %v78, %v84
    %v89 = vmul.f32 %v79, %v84
    %v91 = vlaneseq
    %v92 = vshrl.u32 %v91, 7
    %v93 = vsub.s32 0, %v92
    %v94 = vrot.slane %v34, %v93
    %v96 = vadd.f32 %v86, %v94
    %v97 = vadd.f32 %v87, %v94
    %v98 = vadd.f32 %v88, %v94
    %v99 = vadd.f32 %v89, %v94
    %v100 = vpack.c.bf16 %v97, %v96
    %v101 = vpack.c.bf16 %v99, %v98
    %v104 = vunpack.c.l.b16 %v100
    %v105 = vunpack.c.h.b16 %v100
    %v106 = vunpack.c.l.b16 %v101
    %v107 = vunpack.c.h.b16 %v101
    %v108 = vpack.c.b16 %v104, %v104
    %v109 = vpack.c.b16 %v105, %v105
    %v110 = vpack.c.b16 %v106, %v106
    %v111 = vpack.c.b16 %v107, %v107
    %116 = vst [vmem:[#allocation5] sm:$0xf] %v108
    %117 = vst [vmem:[#allocation5 + $0x4] sm:$0xf] %v109
    %118 = vst [vmem:[#allocation5 + $0x8] sm:$0xf] %v110
    %119 = vst [vmem:[#allocation5 + $0xc] sm:$0xf] %v111
    // Predicated region
    $region18: #{tpu_custom_call.1} parent=1 // pred_check
      _
    $region19: #{tpu_custom_call.1} parent=1 // pred_check_branch
      %121 = sbr.rel (0) target = $region21
    $region20: #{tpu_custom_call.1} parent=1 // pred_region
      %s123 = ssub.s32 256, 256
      %124 = vsyncadd [#allocation4], %s123
      %s125 = sshll.u32 [#allocation5], 4
      %s126 = int_to_ptr.vmem [resolvable:$true] %s125
      %131 = dma.vmem_to_hbm [thread:$0]  %s126, 256, %s3, [#allocation4], 64, 64, 4
    $region21: #{tpu_custom_call.1} parent=1 // pred_fallthru
      _
    // Predicated region
    $region22: #{tpu_custom_call.1} parent=1 // pred_check
      _
    $region23: #{tpu_custom_call.1} parent=1 // pred_check_branch
      %133 = sbr.rel (0) target = $region25
    $region24: #{tpu_custom_call.1} parent=1 // pred_region
      %134 = dma.done [#allocation4], 256
    $region25: #{tpu_custom_call.1} parent=1 // pred_fallthru
      _
    %135 = vsyncpa [#allocation3], 1
    %136 = vsyncpa [#allocation4], 1

</llo_original>
